<compile_context>
chip_gen: v5e
topology: v5e:2x2
jax: 0.10.0
libtpu: 0.0.40
codegen_flags: <defaults>
</compile_context>

<pallas_src>
import functools

import jax
import jax.numpy as jnp
import numpy as np
from jax.experimental import pallas as pl
from jax.experimental.pallas import tpu as pltpu


# ---------------------------------------------------------------------------
# Fused Pallas kernel: GEMM (bf16 in, f32 acc) + BatchNorm(train) + ReLU, channels-on-sublanes
# ---------------------------------------------------------------------------
def fused_deconv_bn_relu_kernel(p_ref, w_ref, g_ref, b_ref, o_ref, *,
                                n_batch, hw, c_out, eps, inv_count):
    # p_ref: (Kp, M)        bf16 patches (3x3-window im2col), cols ordered (n, h, w)
    # w_ref: (4*c_out, Kp)  bf16 sub-pixel weights, rows ordered (parity, channel)
    # g_ref/b_ref: (c_out, 1) f32 gamma / beta
    # o_ref: (n_batch, 4*c_out, hw) f32 -- parity+channel on sublanes, HW on lanes
    conv = jnp.dot(w_ref[...], p_ref[...],
                   preferred_element_type=jnp.float32)           # (4*c_out, M), MXU

    # --- training-mode BatchNorm statistics (per real channel) -------------
    # A channel's population is its 4 parity rows x all M columns (no M padding).
    s1 = jnp.sum(conv, axis=1, keepdims=True)                    # (4*c_out, 1), lane reduce
    mean = (s1[0:c_out] + s1[c_out:2 * c_out]
            + s1[2 * c_out:3 * c_out] + s1[3 * c_out:4 * c_out]) * inv_count
    mean4 = jnp.concatenate([mean] * 4, axis=0)                  # (4*c_out, 1)

    centered = conv - mean4                                      # centered 2nd pass (robust)
    s2 = jnp.sum(centered * centered, axis=1, keepdims=True)
    var = (s2[0:c_out] + s2[c_out:2 * c_out]
           + s2[2 * c_out:3 * c_out] + s2[3 * c_out:4 * c_out]) * inv_count
    scale = g_ref[...] * jax.lax.rsqrt(var + eps)                # (c_out, 1), EUP
    scale4 = jnp.concatenate([scale] * 4, axis=0)
    beta4 = jnp.concatenate([b_ref[...]] * 4, axis=0)

    y = jnp.maximum(centered * scale4 + beta4, 0.0)              # (4*c_out, M), VPU

    # Lane-dense store (hw = multiple of 128); no in-kernel transpose.
    for n in range(n_batch):                                     # small static unroll
        o_ref[n] = y[:, n * hw:(n + 1) * hw]


# ---------------------------------------------------------------------------
# Glue: sub-pixel patch / weight construction (stride-2 zero structure exploited)
# ---------------------------------------------------------------------------
def _subpixel_patches(x_bf16):
    """x: (N, C, H, W) bf16 -> patches (9*C, N*H*W) bf16.

    Rows ordered (tap=(a,b) of the 3x3 neighbourhood of the ORIGINAL input, c);
    cols ordered (n, h, w).  The 3x3 window is the union of the 2x2 tap sets of
    the 4 output-pixel parities."""
    N, C, H, W = x_bf16.shape
    xp = jnp.pad(x_bf16, ((0, 0), (0, 0), (1, 1), (1, 1)))       # (N, C, H+2, W+2)
    xp = jnp.transpose(xp, (1, 0, 2, 3))                         # (C, N, H+2, W+2), tiny
    views = [xp[:, :, a:a + H, b:b + W] for a in range(3) for b in range(3)]
    return jnp.stack(views, axis=0).reshape(9 * C, N * H * W)


def _subpixel_weight(w_t, c_out):
    """PyTorch ConvTranspose2d weight (C_in, C_out, 4, 4) -> (4*C_out, 9*C_in) GEMM weight.

    Output row (p, co) with p = ph*2 + pw; for 3x3-window tap (a, b) the active kernel
    tap is (kh, kw) = (ph + 3 - 2a, pw + 3 - 2b) when in range (the other taps land on
    structural zeros of the stride-2 dilation and get zero weight)."""
    c_in = w_t.shape[0]
    par_blocks = []
    for ph in range(2):
        for pw in range(2):
            taps = []
            for a in range(3):
                for b in range(3):
                    kh = ph + 3 - 2 * a
                    kw = pw + 3 - 2 * b
                    if 0 <= kh <= 3 and 0 <= kw <= 3:
                        taps.append(jnp.transpose(w_t[:, :, kh, kw]))   # (C_out, C_in)
                    else:
                        taps.append(jnp.zeros((c_out, c_in), w_t.dtype))
            par_blocks.append(jnp.stack(taps, axis=1))           # (C_out, 9, C_in)
    w = jnp.stack(par_blocks, axis=0)                            # (4, C_out, 9, C_in)
    return w.reshape(4 * c_out, 9 * c_in)


def _round_up(v, m):
    return ((v + m - 1) // m) * m


# ---------------------------------------------------------------------------
# Wrapper: full ConvDecoder forward
# ---------------------------------------------------------------------------
def conv_decoder_forward(x, w_t, bias, gamma, beta, *, eps=1e-5):
    """x: (N, C_in, H, W) NCHW; w_t: (C_in, C_out, 4, 4) PyTorch ConvTranspose2d weight.

    `bias` is accepted for parameter parity but not applied: TRAINING-mode BatchNorm
    subtracts the batch mean, so a pre-BN per-channel bias cancels exactly.  Eval-mode
    BN (running stats) would need the bias re-added."""
    del bias
    N, c_in, H, W = x.shape
    c_out = w_t.shape[1]
    hw = H * W
    m_cols = N * hw
    k_real = 9 * c_in
    kp = _round_up(k_real, 128)

    # bf16 from the start; patches built directly in the (K, M) orientation the GEMM wants.
    patches = _subpixel_patches(x.astype(jnp.bfloat16))          # (9*C_in, M)
    patches = jnp.pad(patches, ((0, kp - k_real), (0, 0)))       # lane-dense K for the MXU

    w_mat = _subpixel_weight(w_t.astype(jnp.float32), c_out)     # (4*C_out, 9*C_in)
    w_mat = jnp.pad(w_mat, ((0, 0), (0, kp - k_real))).astype(jnp.bfloat16)

    gamma2 = gamma.astype(jnp.float32).reshape(c_out, 1)
    beta2 = beta.astype(jnp.float32).reshape(c_out, 1)

    kernel = functools.partial(
        fused_deconv_bn_relu_kernel,
        n_batch=N, hw=hw, c_out=c_out, eps=eps,
        inv_count=1.0 / float(4 * m_cols))                       # count = N*Ho*Wo, no M padding

    cost = pl.CostEstimate(
        flops=2 * (4 * c_out) * kp * m_cols + 8 * (4 * c_out) * m_cols,
        transcendentals=c_out,
        bytes_accessed=(patches.size * 2 + w_mat.size * 2
                        + (gamma2.size + beta2.size) * 4
                        + N * 4 * c_out * hw * 4))

    vmem = pl.BlockSpec(memory_space=pltpu.MemorySpace.VMEM)
    out = pl.pallas_call(
        kernel,
        out_shape=jax.ShapeDtypeStruct((N, 4 * c_out, hw), jnp.float32),
        in_specs=[vmem, vmem, vmem, vmem],
        out_specs=vmem,
        cost_estimate=cost,
    )(patches, w_mat, gamma2, beta2)

    # Pixel-shuffle the 4 parity planes into the (2H, 2W) grid: tiny (64 KiB) XLA
    # transpose, kept outside the kernel so the kernel store stays lane-dense.
    out = out.reshape(N, 2, 2, c_out, H, W)                      # (n, ph, pw, co, h, w)
    out = jnp.transpose(out, (0, 3, 4, 1, 5, 2))                 # (n, co, h, ph, w, pw)
    return out.reshape(N, c_out, 2 * H, 2 * W)


# ---------------------------------------------------------------------------
# Pure-JAX reference (for sanity checking the Pallas path)
# ---------------------------------------------------------------------------
def conv_decoder_reference(x, w_t, bias, gamma, beta, eps=1e-5):
    # ConvTranspose2d(k=4, s=2, p=1) == dilate-by-2, pad-by-2, regular conv
    # with spatially flipped kernel (O, I, kh, kw).
    w_conv = jnp.transpose(w_t[:, :, ::-1, ::-1], (1, 0, 2, 3))
    conv = jax.lax.conv_general_dilated(
        x, w_conv, window_strides=(1, 1), padding=((2, 2), (2, 2)),
        lhs_dilation=(2, 2), dimension_numbers=("NCHW", "OIHW", "NCHW"))
    conv = conv + bias[None, :, None, None]
    mean = jnp.mean(conv, axis=(0, 2, 3), keepdims=True)
    var = jnp.mean((conv - mean) ** 2, axis=(0, 2, 3), keepdims=True)
    y = (conv - mean) * jax.lax.rsqrt(var + eps)
    y = y * gamma[None, :, None, None] + beta[None, :, None, None]
    return jnp.maximum(y, 0.0)


if __name__ == "__main__":
    key = jax.random.PRNGKey(0)
    k_x, k_w, k_b, k_g, k_bt = jax.random.split(key, 5)

    # Shapes matching SiameseEncoder.deconv_1 = ConvDecoder(32, 8) at 16x16 spatial:
    # input (2, 32, 16, 16) -> output (2, 8, 32, 32).
    N, C_in, C_out, H, W = 2, 32, 8, 16, 16
    x = jax.random.normal(k_x, (N, C_in, H, W), dtype=jnp.float32)

    # Deterministic synthetic parameters (PyTorch layout/shapes).
    w_t = 0.1 * jax.random.normal(k_w, (C_in, C_out, 4, 4), dtype=jnp.float32)
    bias = 0.1 * jax.random.normal(k_b, (C_out,), dtype=jnp.float32)
    gamma = 1.0 + 0.1 * jax.random.normal(k_g, (C_out,), dtype=jnp.float32)
    beta = 0.1 * jax.random.normal(k_bt, (C_out,), dtype=jnp.float32)

    out = conv_decoder_forward(x, w_t, bias, gamma, beta)
    out = jax.block_until_ready(out)

    ref = jax.block_until_ready(conv_decoder_reference(x, w_t, bias, gamma, beta))
    # bf16 MXU inputs introduce ~1e-2-level differences vs. the f32 reference.
    np.testing.assert_allclose(np.asarray(out), np.asarray(ref), atol=5e-2, rtol=5e-2)

    print("KERNEL_OK")
</pallas_src>

<mosaic_0001>
module attributes {stable_mosaic.version = 11 : i64} {
  func.func @fused_deconv_bn_relu_kernel(%arg0: memref<384x512xbf16, #tpu.memory_space<vmem>>, %arg1: memref<32x384xbf16, #tpu.memory_space<vmem>>, %arg2: memref<8x1xf32, #tpu.memory_space<vmem>>, %arg3: memref<8x1xf32, #tpu.memory_space<vmem>>, %arg4: memref<2x32x256xf32, #tpu.memory_space<vmem>>) attributes {dimension_semantics = [], scalar_prefetch = 0 : i64, scratch_operands = 0 : i64, tpu.core_type = #tpu.core_type<tc>} {
    %c0 = arith.constant 0 : index
    %c0_0 = arith.constant 0 : index
    %0 = vector.load %arg1[%c0, %c0_0] : memref<32x384xbf16, #tpu.memory_space<vmem>>, vector<32x384xbf16>
    %c0_1 = arith.constant 0 : index
    %c0_2 = arith.constant 0 : index
    %1 = vector.load %arg0[%c0_1, %c0_2] : memref<384x512xbf16, #tpu.memory_space<vmem>>, vector<384x512xbf16>
    %cst = arith.constant dense<0.000000e+00> : vector<32x512xf32>
    %2 = tpu.matmul %0, %1, %cst {dimension_numbers = #tpu.dot_dimension_numbers<[1], [0], [0], [1], [0, 0, 1, 1], [], []>} : vector<32x384xbf16>, vector<384x512xbf16>, vector<32x512xf32> -> vector<32x512xf32>
    %cst_3 = arith.constant dense<0.000000e+00> : vector<32xf32>
    %3 = vector.multi_reduction <add>, %2, %cst_3 [1] : vector<32x512xf32> to vector<32xf32>
    %4 = vector.shape_cast %3 : vector<32xf32> to vector<32x1xf32>
    %5 = vector.extract_strided_slice %4 {offsets = [0, 0], sizes = [8, 1], strides = [1, 1]} : vector<32x1xf32> to vector<8x1xf32>
    %6 = vector.extract_strided_slice %4 {offsets = [8, 0], sizes = [8, 1], strides = [1, 1]} : vector<32x1xf32> to vector<8x1xf32>
    %7 = arith.addf %5, %6 : vector<8x1xf32>
    %8 = vector.extract_strided_slice %4 {offsets = [16, 0], sizes = [8, 1], strides = [1, 1]} : vector<32x1xf32> to vector<8x1xf32>
    %9 = arith.addf %7, %8 : vector<8x1xf32>
    %10 = vector.extract_strided_slice %4 {offsets = [24, 0], sizes = [8, 1], strides = [1, 1]} : vector<32x1xf32> to vector<8x1xf32>
    %11 = arith.addf %9, %10 : vector<8x1xf32>
    %cst_4 = arith.constant 4.8828125E-4 : f32
    %12 = vector.broadcast %cst_4 : f32 to vector<8x1xf32>
    %13 = arith.mulf %11, %12 : vector<8x1xf32>
    %14 = tpu.concatenate %13, %13, %13, %13 in 0 : vector<8x1xf32>, vector<8x1xf32>, vector<8x1xf32>, vector<8x1xf32> -> vector<32x1xf32>
    %15 = vector.broadcast %14 : vector<32x1xf32> to vector<32x512xf32>
    %16 = arith.subf %2, %15 : vector<32x512xf32>
    %17 = arith.mulf %16, %16 : vector<32x512xf32>
    %cst_5 = arith.constant dense<0.000000e+00> : vector<32xf32>
    %18 = vector.multi_reduction <add>, %17, %cst_5 [1] : vector<32x512xf32> to vector<32xf32>
    %19 = vector.shape_cast %18 : vector<32xf32> to vector<32x1xf32>
    %20 = vector.extract_strided_slice %19 {offsets = [0, 0], sizes = [8, 1], strides = [1, 1]} : vector<32x1xf32> to vector<8x1xf32>
    %21 = vector.extract_strided_slice %19 {offsets = [8, 0], sizes = [8, 1], strides = [1, 1]} : vector<32x1xf32> to vector<8x1xf32>
    %22 = arith.addf %20, %21 : vector<8x1xf32>
    %23 = vector.extract_strided_slice %19 {offsets = [16, 0], sizes = [8, 1], strides = [1, 1]} : vector<32x1xf32> to vector<8x1xf32>
    %24 = arith.addf %22, %23 : vector<8x1xf32>
    %25 = vector.extract_strided_slice %19 {offsets = [24, 0], sizes = [8, 1], strides = [1, 1]} : vector<32x1xf32> to vector<8x1xf32>
    %26 = arith.addf %24, %25 : vector<8x1xf32>
    %cst_6 = arith.constant 4.8828125E-4 : f32
    %27 = vector.broadcast %cst_6 : f32 to vector<8x1xf32>
    %28 = arith.mulf %26, %27 : vector<8x1xf32>
    %c0_7 = arith.constant 0 : index
    %c0_8 = arith.constant 0 : index
    %29 = vector.load %arg2[%c0_7, %c0_8] : memref<8x1xf32, #tpu.memory_space<vmem>>, vector<8x1xf32>
    %cst_9 = arith.constant 9.99999974E-6 : f32
    %30 = vector.broadcast %cst_9 : f32 to vector<8x1xf32>
    %31 = arith.addf %28, %30 : vector<8x1xf32>
    %32 = math.rsqrt %31 : vector<8x1xf32>
    %33 = arith.mulf %29, %32 : vector<8x1xf32>
    %34 = tpu.concatenate %33, %33, %33, %33 in 0 : vector<8x1xf32>, vector<8x1xf32>, vector<8x1xf32>, vector<8x1xf32> -> vector<32x1xf32>
    %c0_10 = arith.constant 0 : index
    %c0_11 = arith.constant 0 : index
    %35 = vector.load %arg3[%c0_10, %c0_11] : memref<8x1xf32, #tpu.memory_space<vmem>>, vector<8x1xf32>
    %36 = tpu.concatenate %35, %35, %35, %35 in 0 : vector<8x1xf32>, vector<8x1xf32>, vector<8x1xf32>, vector<8x1xf32> -> vector<32x1xf32>
    %37 = vector.broadcast %34 : vector<32x1xf32> to vector<32x512xf32>
    %38 = arith.mulf %16, %37 : vector<32x512xf32>
    %39 = vector.broadcast %36 : vector<32x1xf32> to vector<32x512xf32>
    %40 = arith.addf %38, %39 : vector<32x512xf32>
    %cst_12 = arith.constant 0.000000e+00 : f32
    %41 = vector.broadcast %cst_12 : f32 to vector<32x512xf32>
    %42 = arith.maximumf %40, %41 : vector<32x512xf32>
    %43 = vector.extract_strided_slice %42 {offsets = [0, 0], sizes = [32, 256], strides = [1, 1]} : vector<32x512xf32> to vector<32x256xf32>
    %c0_13 = arith.constant 0 : index
    %c0_14 = arith.constant 0 : index
    %c0_15 = arith.constant 0 : index
    %44 = vector.load %arg4[%c0_13, %c0_14, %c0_15] : memref<2x32x256xf32, #tpu.memory_space<vmem>>, vector<1x32x256xf32>
    %45 = vector.shape_cast %44 : vector<1x32x256xf32> to vector<32x256xf32>
    %46 = vector.shape_cast %43 : vector<32x256xf32> to vector<1x32x256xf32>
    tpu.vector_store %arg4[%c0_13, %c0_14, %c0_15], %46 {strides = array<i32>} : memref<2x32x256xf32, #tpu.memory_space<vmem>>, vector<1x32x256xf32>,
    %47 = vector.extract_strided_slice %42 {offsets = [0, 256], sizes = [32, 256], strides = [1, 1]} : vector<32x512xf32> to vector<32x256xf32>
    %c1 = arith.constant 1 : index
    %c0_16 = arith.constant 0 : index
    %c0_17 = arith.constant 0 : index
    %48 = vector.load %arg4[%c1, %c0_16, %c0_17] : memref<2x32x256xf32, #tpu.memory_space<vmem>>, vector<1x32x256xf32>
    %49 = vector.shape_cast %48 : vector<1x32x256xf32> to vector<32x256xf32>
    %50 = vector.shape_cast %47 : vector<32x256xf32> to vector<1x32x256xf32>
    tpu.vector_store %arg4[%c1, %c0_16, %c0_17], %50 {strides = array<i32>} : memref<2x32x256xf32, #tpu.memory_space<vmem>>, vector<1x32x256xf32>,
    return
  }
}

</mosaic_0001>

<llo_original>
// kernel: tpu_custom_call.1
$region0: #{tpu_custom_call.1}
  #allocation0 [shape = 'u32[]', space=smem, size = 0x4, offset = 0x4, fixed_abs, tag = 'smem constant byte address 0x4 - core index']
  #allocation1 [shape = 'u32[72,128]{1,0:T(1,128)}', space=vmem, size = 0x9000, scoped, tag = 'internal scratch']
  %s0 = inlined_call_operand.hbm [shape: bf16[384,512], index: 0, kind: input, shape index: {}]
  %s1 = inlined_call_operand.hbm [shape: bf16[32,384], index: 1, kind: input, shape index: {}]
  %s2 = inlined_call_operand.vmem [shape: f32[8,1], index: 2, kind: input, shape index: {}]
  %s3 = inlined_call_operand.vmem [shape: f32[8,1], index: 3, kind: input, shape index: {}]
  %s4 = inlined_call_operand.hbm [shape: f32[2,32,256], index: 4, kind: output, shape index: {}]
  %s5 = sld [smem:[#allocation0]]
  $region34: #{tpu_custom_call.1} parent=0
    _
  %s7 = ssub.s32 1, %s5
  %s8 = scalar_select 0, %s7, %s5
  $region1: #{tpu_custom_call.1} parent=0
    #allocation2 [shape = 'u8[393216]{0}', space=vmem, size = 0x60000, scoped, tag = 'input window, operand 0, single buffered']
    #allocation3 [shape = 's32[1]{0}', space=sflag, size = 0x4, scoped, tag = 'scoped memory for tpu_custom_call.1']
    #allocation4 [shape = 's32[1]{0}', space=sflag, size = 0x4, scoped, tag = 'scoped memory for tpu_custom_call.1']
    #allocation5 [shape = 'u8[24576]{0}', space=vmem, size = 0x6000, scoped, tag = 'input window, operand 1, single buffered']
    #allocation6 [shape = 's32[1]{0}', space=sflag, size = 0x4, scoped, tag = 'scoped memory for tpu_custom_call.1']
    #allocation7 [shape = 'u8[65536]{0}', space=vmem, size = 0x10000, scoped, tag = 'output window, operand 0, single buffered']
    %9 = vsyncpa [#allocation3], 0
    %10 = vsyncpa [#allocation6], 0
    %11 = vsyncpa [#allocation4], 0
    // Predicated region
    $region2: #{tpu_custom_call.1} parent=1 // pred_check
      _
    $region3: #{tpu_custom_call.1} parent=1 // pred_check_branch
      %13 = sbr.rel (0) target = $region5
    $region4: #{tpu_custom_call.1} parent=1 // pred_region
      %15 = vsyncadd [#allocation3], 0
      %s16 = sshll.u32 %s0, 4
      %s17 = int_to_ptr.hbm [resolvable:$true] %s16
      %s18 = sshll.u32 [#allocation2], 4
      %s19 = int_to_ptr.vmem [resolvable:$true] %s18
      %24 = dma.hbm_to_vmem [thread:$0]  %s17, 12288, %s19, [#allocation3], 256, 256, 16
    $region5: #{tpu_custom_call.1} parent=1 // pred_fallthru
      _
    // Predicated region
    $region6: #{tpu_custom_call.1} parent=1 // pred_check
      _
    $region7: #{tpu_custom_call.1} parent=1 // pred_check_branch
      %26 = sbr.rel (0) target = $region9
    $region8: #{tpu_custom_call.1} parent=1 // pred_region
      %28 = vsyncadd [#allocation6], 0
      %s29 = sshll.u32 %s1, 4
      %s30 = int_to_ptr.hbm [resolvable:$true] %s29
      %s31 = sshll.u32 [#allocation5], 4
      %s32 = int_to_ptr.vmem [resolvable:$true] %s31
      %37 = dma.hbm_to_vmem [thread:$0]  %s30, 768, %s32, [#allocation6], 192, 192, 12
    $region9: #{tpu_custom_call.1} parent=1 // pred_fallthru
      _
    // Predicated region
    $region10: #{tpu_custom_call.1} parent=1 // pred_check
      _
    $region11: #{tpu_custom_call.1} parent=1 // pred_check_branch
      %39 = sbr.rel (0) target = $region13
    $region12: #{tpu_custom_call.1} parent=1 // pred_region
      _
    $region13: #{tpu_custom_call.1} parent=1 // pred_fallthru
      _
    // Predicated region
    $region14: #{tpu_custom_call.1} parent=1 // pred_check
      _
    $region15: #{tpu_custom_call.1} parent=1 // pred_check_branch
      %41 = sbr.rel (0) target = $region17
    $region16: #{tpu_custom_call.1} parent=1 // pred_region
      _
    $region17: #{tpu_custom_call.1} parent=1 // pred_fallthru
      _
    // Predicated region
    $region18: #{tpu_custom_call.1} parent=1 // pred_check
      _
    $region19: #{tpu_custom_call.1} parent=1 // pred_check_branch
      %43 = sbr.rel (0) target = $region21
    $region20: #{tpu_custom_call.1} parent=1 // pred_region
      %45 = dma.done [#allocation3], 12288
    $region21: #{tpu_custom_call.1} parent=1 // pred_fallthru
      _
    // Predicated region
    $region22: #{tpu_custom_call.1} parent=1 // pred_check
      _
    $region23: #{tpu_custom_call.1} parent=1 // pred_check_branch
      %47 = sbr.rel (0) target = $region25
    $region24: #{tpu_custom_call.1} parent=1 // pred_region
      %49 = dma.done [#allocation6], 768
    $region25: #{tpu_custom_call.1} parent=1 // pred_fallthru
      _
    %v50 = vld [vmem:[#allocation5] sm:$0xff]
    %v51 = vld [vmem:[#allocation5 + $0x8] sm:$0xf]
    %v52 = vld [vmem:[#allocation5 + $0xc] sm:$0xff]
    %v53 = vld [vmem:[#allocation5 + $0x14] sm:$0xf]
    %v54 = vld [vmem:[#allocation5 + $0x18] sm:$0xff]
    %v55 = vld [vmem:[#allocation5 + $0x20] sm:$0xf]
    %v56 = vld [vmem:[#allocation5 + $0x24] sm:$0xff]
    %v57 = vld [vmem:[#allocation5 + $0x2c] sm:$0xf]
    %v58 = vld [vmem:[#allocation2] sm:$0xff]
    %v59 = vld [vmem:[#allocation2 + $0x8] sm:$0xff]
    %v60 = vld [vmem:[#allocation2 + $0x10] sm:$0xff]
    %v61 = vld [vmem:[#allocation2 + $0x18] sm:$0xff]
    %v62 = vld [vmem:[#allocation2 + $0x20] sm:$0xff]
    %v63 = vld [vmem:[#allocation2 + $0x28] sm:$0xff]
    %v64 = vld [vmem:[#allocation2 + $0x30] sm:$0xff]
    %v65 = vld [vmem:[#allocation2 + $0x38] sm:$0xff]
    %v66 = vld [vmem:[#allocation2 + $0x40] sm:$0xff]
    %v67 = vld [vmem:[#allocation2 + $0x48] sm:$0xff]
    %v68 = vld [vmem:[#allocation2 + $0x50] sm:$0xff]
    %v69 = vld [vmem:[#allocation2 + $0x58] sm:$0xff]
    %v70 = vld [vmem:[#allocation2 + $0x60] sm:$0xff]
    %v71 = vld [vmem:[#allocation2 + $0x68] sm:$0xff]
    %v72 = vld [vmem:[#allocation2 + $0x70] sm:$0xff]
    %v73 = vld [vmem:[#allocation2 + $0x78] sm:$0xff]
    %v74 = vld [vmem:[#allocation2 + $0x80] sm:$0xff]
    %v75 = vld [vmem:[#allocation2 + $0x88] sm:$0xff]
    %v76 = vld [vmem:[#allocation2 + $0x90] sm:$0xff]
    %v77 = vld [vmem:[#allocation2 + $0x98] sm:$0xff]
    %v78 = vld [vmem:[#allocation2 + $0xa0] sm:$0xff]
    %v79 = vld [vmem:[#allocation2 + $0xa8] sm:$0xff]
    %v80 = vld [vmem:[#allocation2 + $0xb0] sm:$0xff]
    %v81 = vld [vmem:[#allocation2 + $0xb8] sm:$0xff]
    %v82 = vld [vmem:[#allocation2 + $0xc0] sm:$0xff]
    %v83 = vld [vmem:[#allocation2 + $0xc8] sm:$0xff]
    %v84 = vld [vmem:[#allocation2 + $0xd0] sm:$0xff]
    %v85 = vld [vmem:[#allocation2 + $0xd8] sm:$0xff]
    %v86 = vld [vmem:[#allocation2 + $0xe0] sm:$0xff]
    %v87 = vld [vmem:[#allocation2 + $0xe8] sm:$0xff]
    %v88 = vld [vmem:[#allocation2 + $0xf0] sm:$0xff]
    %v89 = vld [vmem:[#allocation2 + $0xf8] sm:$0xff]
    %v90 = vld [vmem:[#allocation2 + $0x100] sm:$0xff]
    %v91 = vld [vmem:[#allocation2 + $0x108] sm:$0xff]
    %v92 = vld [vmem:[#allocation2 + $0x110] sm:$0xff]
    %v93 = vld [vmem:[#allocation2 + $0x118] sm:$0xff]
    %v94 = vld [vmem:[#allocation2 + $0x120] sm:$0xff]
    %v95 = vld [vmem:[#allocation2 + $0x128] sm:$0xff]
    %v96 = vld [vmem:[#allocation2 + $0x130] sm:$0xff]
    %v97 = vld [vmem:[#allocation2 + $0x138] sm:$0xff]
    %v98 = vld [vmem:[#allocation2 + $0x140] sm:$0xff]
    %v99 = vld [vmem:[#allocation2 + $0x148] sm:$0xff]
    %v100 = vld [vmem:[#allocation2 + $0x150] sm:$0xff]
    %v101 = vld [vmem:[#allocation2 + $0x158] sm:$0xff]
    %v102 = vld [vmem:[#allocation2 + $0x160] sm:$0xff]
    %v103 = vld [vmem:[#allocation2 + $0x168] sm:$0xff]
    %v104 = vld [vmem:[#allocation2 + $0x170] sm:$0xff]
    %v105 = vld [vmem:[#allocation2 + $0x178] sm:$0xff]
    %v106 = vld [vmem:[#allocation2 + $0x180] sm:$0xff]
    %v107 = vld [vmem:[#allocation2 + $0x188] sm:$0xff]
    %v108 = vld [vmem:[#allocation2 + $0x190] sm:$0xff]
    %v109 = vld [vmem:[#allocation2 + $0x198] sm:$0xff]
    %v110 = vld [vmem:[#allocation2 + $0x1a0] sm:$0xff]
    %v111 = vld [vmem:[#allocation2 + $0x1a8] sm:$0xff]
    %v112 = vld [vmem:[#allocation2 + $0x1b0] sm:$0xff]
    %v113 = vld [vmem:[#allocation2 + $0x1b8] sm:$0xff]
    %v114 = vld [vmem:[#allocation2 + $0x1c0] sm:$0xff]
    %v115 = vld [vmem:[#allocation2 + $0x1c8] sm:$0xff]
    %v116 = vld [vmem:[#allocation2 + $0x1d0] sm:$0xff]
    %v117 = vld [vmem:[#allocation2 + $0x1d8] sm:$0xff]
    %v118 = vld [vmem:[#allocation2 + $0x1e0] sm:$0xff]
    %v119 = vld [vmem:[#allocation2 + $0x1e8] sm:$0xff]
    %v120 = vld [vmem:[#allocation2 + $0x1f0] sm:$0xff]
    %v121 = vld [vmem:[#allocation2 + $0x1f8] sm:$0xff]
    %v122 = vld [vmem:[#allocation2 + $0x200] sm:$0xff]
    %v123 = vld [vmem:[#allocation2 + $0x208] sm:$0xff]
    %v124 = vld [vmem:[#allocation2 + $0x210] sm:$0xff]
    %v125 = vld [vmem:[#allocation2 + $0x218] sm:$0xff]
    %v126 = vld [vmem:[#allocation2 + $0x220] sm:$0xff]
    %v127 = vld [vmem:[#allocation2 + $0x228] sm:$0xff]
    %v128 = vld [vmem:[#allocation2 + $0x230] sm:$0xff]
    %v129 = vld [vmem:[#allocation2 + $0x238] sm:$0xff]
    %v130 = vld [vmem:[#allocation2 + $0x240] sm:$0xff]
    %v131 = vld [vmem:[#allocation2 + $0x248] sm:$0xff]
    %v132 = vld [vmem:[#allocation2 + $0x250] sm:$0xff]
    %v133 = vld [vmem:[#allocation2 + $0x258] sm:$0xff]
    %v134 = vld [vmem:[#allocation2 + $0x260] sm:$0xff]
    %v135 = vld [vmem:[#allocation2 + $0x268] sm:$0xff]
    %v136 = vld [vmem:[#allocation2 + $0x270] sm:$0xff]
    %v137 = vld [vmem:[#allocation2 + $0x278] sm:$0xff]
    %v138 = vld [vmem:[#allocation2 + $0x280] sm:$0xff]
    %v139 = vld [vmem:[#allocation2 + $0x288] sm:$0xff]
    %v140 = vld [vmem:[#allocation2 + $0x290] sm:$0xff]
    %v141 = vld [vmem:[#allocation2 + $0x298] sm:$0xff]
    %v142 = vld [vmem:[#allocation2 + $0x2a0] sm:$0xff]
    %v143 = vld [vmem:[#allocation2 + $0x2a8] sm:$0xff]
    %v144 = vld [vmem:[#allocation2 + $0x2b0] sm:$0xff]
    %v145 = vld [vmem:[#allocation2 + $0x2b8] sm:$0xff]
    %v146 = vld [vmem:[#allocation2 + $0x2c0] sm:$0xff]
    %v147 = vld [vmem:[#allocation2 + $0x2c8] sm:$0xff]
    %v148 = vld [vmem:[#allocation2 + $0x2d0] sm:$0xff]
    %v149 = vld [vmem:[#allocation2 + $0x2d8] sm:$0xff]
    %v150 = vld [vmem:[#allocation2 + $0x2e0] sm:$0xff]
    %v151 = vld [vmem:[#allocation2 + $0x2e8] sm:$0xff]
    %v152 = vld [vmem:[#allocation2 + $0x2f0] sm:$0xff]
    %v153 = vld [vmem:[#allocation2 + $0x2f8] sm:$0xff]
    %v162 = vunpack.c.l.b16 %v50
    %v163 = vunpack.c.h.b16 %v50
    %v164 = vunpack.c.l.b16 %v51
    %v165 = vunpack.c.l.b16 %v52
    %v166 = vunpack.c.h.b16 %v52
    %v167 = vunpack.c.l.b16 %v53
    %v168 = vunpack.c.l.b16 %v54
    %v169 = vunpack.c.h.b16 %v54
    %v170 = vunpack.c.l.b16 %v55
    %v171 = vunpack.c.l.b16 %v56
    %v172 = vunpack.c.h.b16 %v56
    %v173 = vunpack.c.l.b16 %v57
    %v174 = vpack.c.b16 %v165, %v162
    %v175 = vpack.c.b16 %v166, %v163
    %v176 = vpack.c.b16 %v167, %v164
    %v177 = vpack.c.b16 %v171, %v168
    %v178 = vpack.c.b16 %v172, %v169
    %v179 = vpack.c.b16 %v173, %v170
    %v282 = vunpack.c.l.b16 %v58
    %v283 = vunpack.c.h.b16 %v58
    %v284 = vunpack.c.l.b16 %v59
    %v285 = vunpack.c.h.b16 %v59
    %v286 = vunpack.c.l.b16 %v60
    %v287 = vunpack.c.h.b16 %v60
    %v288 = vunpack.c.l.b16 %v61
    %v289 = vunpack.c.h.b16 %v61
    %v290 = vunpack.c.l.b16 %v62
    %v291 = vunpack.c.h.b16 %v62
    %v292 = vunpack.c.l.b16 %v63
    %v293 = vunpack.c.h.b16 %v63
    %v294 = vunpack.c.l.b16 %v64
    %v295 = vunpack.c.h.b16 %v64
    %v296 = vunpack.c.l.b16 %v65
    %v297 = vunpack.c.h.b16 %v65
    %v298 = vunpack.c.l.b16 %v66
    %v299 = vunpack.c.h.b16 %v66
    %v300 = vunpack.c.l.b16 %v67
    %v301 = vunpack.c.h.b16 %v67
    %v302 = vunpack.c.l.b16 %v68
    %v303 = vunpack.c.h.b16 %v68
    %v304 = vunpack.c.l.b16 %v69
    %v305 = vunpack.c.h.b16 %v69
    %v306 = vunpack.c.l.b16 %v70
    %v307 = vunpack.c.h.b16 %v70
    %v308 = vunpack.c.l.b16 %v71
    %v309 = vunpack.c.h.b16 %v71
    %v310 = vunpack.c.l.b16 %v72
    %v311 = vunpack.c.h.b16 %v72
    %v312 = vunpack.c.l.b16 %v73
    %v313 = vunpack.c.h.b16 %v73
    %v314 = vunpack.c.l.b16 %v74
    %v315 = vunpack.c.h.b16 %v74
    %v316 = vunpack.c.l.b16 %v75
    %v317 = vunpack.c.h.b16 %v75
    %v318 = vunpack.c.l.b16 %v76
    %v319 = vunpack.c.h.b16 %v76
    %v320 = vunpack.c.l.b16 %v77
    %v321 = vunpack.c.h.b16 %v77
    %v322 = vunpack.c.l.b16 %v78
    %v323 = vunpack.c.h.b16 %v78
    %v324 = vunpack.c.l.b16 %v79
    %v325 = vunpack.c.h.b16 %v79
    %v326 = vunpack.c.l.b16 %v80
    %v327 = vunpack.c.h.b16 %v80
    %v328 = vunpack.c.l.b16 %v81
    %v329 = vunpack.c.h.b16 %v81
    %v330 = vunpack.c.l.b16 %v82
    %v331 = vunpack.c.h.b16 %v82
    %v332 = vunpack.c.l.b16 %v83
    %v333 = vunpack.c.h.b16 %v83
    %v334 = vunpack.c.l.b16 %v84
    %v335 = vunpack.c.h.b16 %v84
    %v336 = vunpack.c.l.b16 %v85
    %v337 = vunpack.c.h.b16 %v85
    %v338 = vunpack.c.l.b16 %v86
    %v339 = vunpack.c.h.b16 %v86
    %v340 = vunpack.c.l.b16 %v87
    %v341 = vunpack.c.h.b16 %v87
    %v342 = vunpack.c.l.b16 %v88
    %v343 = vunpack.c.h.b16 %v88
    %v344 = vunpack.c.l.b16 %v89
    %v345 = vunpack.c.h.b16 %v89
    %v346 = vunpack.c.l.b16 %v90
    %v347 = vunpack.c.h.b16 %v90
    %v348 = vunpack.c.l.b16 %v91
    %v349 = vunpack.c.h.b16 %v91
    %v350 = vunpack.c.l.b16 %v92
    %v351 = vunpack.c.h.b16 %v92
    %v352 = vunpack.c.l.b16 %v93
    %v353 = vunpack.c.h.b16 %v93
    %v354 = vunpack.c.l.b16 %v94
    %v355 = vunpack.c.h.b16 %v94
    %v356 = vunpack.c.l.b16 %v95
    %v357 = vunpack.c.h.b16 %v95
    %v358 = vunpack.c.l.b16 %v96
    %v359 = vunpack.c.h.b16 %v96
    %v360 = vunpack.c.l.b16 %v97
    %v361 = vunpack.c.h.b16 %v97
    %v362 = vunpack.c.l.b16 %v98
    %v363 = vunpack.c.h.b16 %v98
    %v364 = vunpack.c.l.b16 %v99
    %v365 = vunpack.c.h.b16 %v99
    %v366 = vunpack.c.l.b16 %v100
    %v367 = vunpack.c.h.b16 %v100
    %v368 = vunpack.c.l.b16 %v101
    %v369 = vunpack.c.h.b16 %v101
    %v370 = vunpack.c.l.b16 %v102
    %v371 = vunpack.c.h.b16 %v102
    %v372 = vunpack.c.l.b16 %v103
    %v373 = vunpack.c.h.b16 %v103
    %v374 = vunpack.c.l.b16 %v104
    %v375 = vunpack.c.h.b16 %v104
    %v376 = vunpack.c.l.b16 %v105
    %v377 = vunpack.c.h.b16 %v105
    %v378 = vunpack.c.l.b16 %v106
    %v379 = vunpack.c.h.b16 %v106
    %v380 = vunpack.c.l.b16 %v107
    %v381 = vunpack.c.h.b16 %v107
    %v382 = vunpack.c.l.b16 %v108
    %v383 = vunpack.c.h.b16 %v108
    %v384 = vunpack.c.l.b16 %v109
    %v385 = vunpack.c.h.b16 %v109
    %v386 = vunpack.c.l.b16 %v110
    %v387 = vunpack.c.h.b16 %v110
    %v388 = vunpack.c.l.b16 %v111
    %v389 = vunpack.c.h.b16 %v111
    %v390 = vunpack.c.l.b16 %v112
    %v391 = vunpack.c.h.b16 %v112
    %v392 = vunpack.c.l.b16 %v113
    %v393 = vunpack.c.h.b16 %v113
    %v394 = vunpack.c.l.b16 %v114
    %v395 = vunpack.c.h.b16 %v114
    %v396 = vunpack.c.l.b16 %v115
    %v397 = vunpack.c.h.b16 %v115
    %v398 = vunpack.c.l.b16 %v116
    %v399 = vunpack.c.h.b16 %v116
    %v400 = vunpack.c.l.b16 %v117
    %v401 = vunpack.c.h.b16 %v117
    %v402 = vunpack.c.l.b16 %v118
    %v403 = vunpack.c.h.b16 %v118
    %v404 = vunpack.c.l.b16 %v119
    %v405 = vunpack.c.h.b16 %v119
    %v406 = vunpack.c.l.b16 %v120
    %v407 = vunpack.c.h.b16 %v120
    %v408 = vunpack.c.l.b16 %v121
    %v409 = vunpack.c.h.b16 %v121
    %v410 = vunpack.c.l.b16 %v122
    %v411 = vunpack.c.h.b16 %v122
    %v412 = vunpack.c.l.b16 %v123
    %v413 = vunpack.c.h.b16 %v123
    %v414 = vunpack.c.l.b16 %v124
    %v415 = vunpack.c.h.b16 %v124
    %v416 = vunpack.c.l.b16 %v125
    %v417 = vunpack.c.h.b16 %v125
    %v418 = vunpack.c.l.b16 %v126
    %v419 = vunpack.c.h.b16 %v126
    %v420 = vunpack.c.l.b16 %v127
    %v421 = vunpack.c.h.b16 %v127
    %v422 = vunpack.c.l.b16 %v128
    %v423 = vunpack.c.h.b16 %v128
    %v424 = vunpack.c.l.b16 %v129
    %v425 = vunpack.c.h.b16 %v129
    %v426 = vunpack.c.l.b16 %v130
    %v427 = vunpack.c.h.b16 %v130
    %v428 = vunpack.c.l.b16 %v131
    %v429 = vunpack.c.h.b16 %v131
    %v430 = vunpack.c.l.b16 %v132
    %v431 = vunpack.c.h.b16 %v132
    %v432 = vunpack.c.l.b16 %v133
    %v433 = vunpack.c.h.b16 %v133
    %v434 = vunpack.c.l.b16 %v134
    %v435 = vunpack.c.h.b16 %v134
    %v436 = vunpack.c.l.b16 %v135
    %v437 = vunpack.c.h.b16 %v135
    %v438 = vunpack.c.l.b16 %v136
    %v439 = vunpack.c.h.b16 %v136
    %v440 = vunpack.c.l.b16 %v137
    %v441 = vunpack.c.h.b16 %v137
    %v442 = vunpack.c.l.b16 %v138
    %v443 = vunpack.c.h.b16 %v138
    %v444 = vunpack.c.l.b16 %v139
    %v445 = vunpack.c.h.b16 %v139
    %v446 = vunpack.c.l.b16 %v140
    %v447 = vunpack.c.h.b16 %v140
    %v448 = vunpack.c.l.b16 %v141
    %v449 = vunpack.c.h.b16 %v141
    %v450 = vunpack.c.l.b16 %v142
    %v451 = vunpack.c.h.b16 %v142
    %v452 = vunpack.c.l.b16 %v143
    %v453 = vunpack.c.h.b16 %v143
    %v454 = vunpack.c.l.b16 %v144
    %v455 = vunpack.c.h.b16 %v144
    %v456 = vunpack.c.l.b16 %v145
    %v457 = vunpack.c.h.b16 %v145
    %v458 = vunpack.c.l.b16 %v146
    %v459 = vunpack.c.h.b16 %v146
    %v460 = vunpack.c.l.b16 %v147
    %v461 = vunpack.c.h.b16 %v147
    %v462 = vunpack.c.l.b16 %v148
    %v463 = vunpack.c.h.b16 %v148
    %v464 = vunpack.c.l.b16 %v149
    %v465 = vunpack.c.h.b16 %v149
    %v466 = vunpack.c.l.b16 %v150
    %v467 = vunpack.c.h.b16 %v150
    %v468 = vunpack.c.l.b16 %v151
    %v469 = vunpack.c.h.b16 %v151
    %v470 = vunpack.c.l.b16 %v152
    %v471 = vunpack.c.h.b16 %v152
    %v472 = vunpack.c.l.b16 %v153
    %v473 = vunpack.c.h.b16 %v153
    %v474 = vpack.c.b16 %v286, %v282
    %v475 = vpack.c.b16 %v287, %v283
    %v476 = vpack.c.b16 %v288, %v284
    %v477 = vpack.c.b16 %v289, %v285
    %v478 = vpack.c.b16 %v294, %v290
    %v479 = vpack.c.b16 %v295, %v291
    %v480 = vpack.c.b16 %v296, %v292
    %v481 = vpack.c.b16 %v297, %v293
    %v482 = vpack.c.b16 %v302, %v298
    %v483 = vpack.c.b16 %v303, %v299
    %v484 = vpack.c.b16 %v304, %v300
    %v485 = vpack.c.b16 %v305, %v301
    %v486 = vpack.c.b16 %v310, %v306
    %v487 = vpack.c.b16 %v311, %v307
    %v488 = vpack.c.b16 %v312, %v308
    %v489 = vpack.c.b16 %v313, %v309
    %v490 = vpack.c.b16 %v318, %v314
    %v491 = vpack.c.b16 %v319, %v315
    %v492 = vpack.c.b16 %v320, %v316
    %v493 = vpack.c.b16 %v321, %v317
    %v494 = vpack.c.b16 %v326, %v322
    %v495 = vpack.c.b16 %v327, %v323
    %v496 = vpack.c.b16 %v328, %v324
    %v497 = vpack.c.b16 %v329, %v325
    %v498 = vpack.c.b16 %v334, %v330
    %v499 = vpack.c.b16 %v335, %v331
    %v500 = vpack.c.b16 %v336, %v332
    %v501 = vpack.c.b16 %v337, %v333
    %v502 = vpack.c.b16 %v342, %v338
    %v503 = vpack.c.b16 %v343, %v339
    %v504 = vpack.c.b16 %v344, %v340
    %v505 = vpack.c.b16 %v345, %v341
    %v506 = vpack.c.b16 %v350, %v346
    %v507 = vpack.c.b16 %v351, %v347
    %v508 = vpack.c.b16 %v352, %v348
    %v509 = vpack.c.b16 %v353, %v349
    %v510 = vpack.c.b16 %v358, %v354
    %v511 = vpack.c.b16 %v359, %v355
    %v512 = vpack.c.b16 %v360, %v356
    %v513 = vpack.c.b16 %v361, %v357
    %v514 = vpack.c.b16 %v366, %v362
    %v515 = vpack.c.b16 %v367, %v363
    %v516 = vpack.c.b16 %v368, %v364
    %v517 = vpack.c.b16 %v369, %v365
    %v518 = vpack.c.b16 %v374, %v370
    %v519 = vpack.c.b16 %v375, %v371
    %v520 = vpack.c.b16 %v376, %v372
    %v521 = vpack.c.b16 %v377, %v373
    %v522 = vpack.c.b16 %v382, %v378
    %v523 = vpack.c.b16 %v383, %v379
    %v524 = vpack.c.b16 %v384, %v380
    %v525 = vpack.c.b16 %v385, %v381
    %v526 = vpack.c.b16 %v390, %v386
    %v527 = vpack.c.b16 %v391, %v387
    %v528 = vpack.c.b16 %v392, %v388
    %v529 = vpack.c.b16 %v393, %v389
    %v530 = vpack.c.b16 %v398, %v394
    %v531 = vpack.c.b16 %v399, %v395
    %v532 = vpack.c.b16 %v400, %v396
    %v533 = vpack.c.b16 %v401, %v397
    %v534 = vpack.c.b16 %v406, %v402
    %v535 = vpack.c.b16 %v407, %v403
    %v536 = vpack.c.b16 %v408, %v404
    %v537 = vpack.c.b16 %v409, %v405
    %v538 = vpack.c.b16 %v414, %v410
    %v539 = vpack.c.b16 %v415, %v411
    %v540 = vpack.c.b16 %v416, %v412
    %v541 = vpack.c.b16 %v417, %v413
    %v542 = vpack.c.b16 %v422, %v418
    %v543 = vpack.c.b16 %v423, %v419
    %v544 = vpack.c.b16 %v424, %v420
    %v545 = vpack.c.b16 %v425, %v421
    %v546 = vpack.c.b16 %v430, %v426
    %v547 = vpack.c.b16 %v431, %v427
    %v548 = vpack.c.b16 %v432, %v428
    %v549 = vpack.c.b16 %v433, %v429
    %v550 = vpack.c.b16 %v438, %v434
    %v551 = vpack.c.b16 %v439, %v435
    %v552 = vpack.c.b16 %v440, %v436
    %v553 = vpack.c.b16 %v441, %v437
    %v554 = vpack.c.b16 %v446, %v442
    %v555 = vpack.c.b16 %v447, %v443
    %v556 = vpack.c.b16 %v448, %v444
    %v557 = vpack.c.b16 %v449, %v445
    %v558 = vpack.c.b16 %v454, %v450
    %v559 = vpack.c.b16 %v455, %v451
    %v560 = vpack.c.b16 %v456, %v452
    %v561 = vpack.c.b16 %v457, %v453
    %v562 = vpack.c.b16 %v462, %v458
    %v563 = vpack.c.b16 %v463, %v459
    %v564 = vpack.c.b16 %v464, %v460
    %v565 = vpack.c.b16 %v465, %v461
    %v566 = vpack.c.b16 %v470, %v466
    %v567 = vpack.c.b16 %v471, %v467
    %v568 = vpack.c.b16 %v472, %v468
    %v569 = vpack.c.b16 %v473, %v469
    %666 = vmatpush.bf16.msra.mxu0 %v502
    %667 = vmatpush.bf16.msra.mxu0 %v498
    %668 = vmatpush.bf16.msra.mxu0 %v494
    %669 = vmatpush.bf16.msra.mxu0 %v490
    %670 = vmatpush.bf16.msra.mxu0 %v486
    %671 = vmatpush.bf16.msra.mxu0 %v482
    %672 = vmatpush.bf16.msra.mxu0 %v478
    %673 = vmatpush.bf16.msra.mxu0 %v474
    %674 = vmatmul.bf16.gmra.mxu0 %v174
    %v675 = vpop.f32.mrf.mxu0
    %v676 = vadd.f32 0.0, %v675
    %v677 = vpop.f32.mrf.mxu0
    %v678 = vadd.f32 0.0, %v677
    %679 = vmatmul.bf16.gmra.mxu0 %v177
    %v680 = vpop.f32.mrf.mxu0
    %v681 = vadd.f32 0.0, %v680
    %v682 = vpop.f32.mrf.mxu0
    %v683 = vadd.f32 0.0, %v682
    %684 = vdwg.mxu0
    %685 = vmatpush.bf16.msra.mxu0 %v534
    %686 = vmatpush.bf16.msra.mxu0 %v530
    %687 = vmatpush.bf16.msra.mxu0 %v526
    %688 = vmatpush.bf16.msra.mxu0 %v522
    %689 = vmatpush.bf16.msra.mxu0 %v518
    %690 = vmatpush.bf16.msra.mxu0 %v514
    %691 = vmatpush.bf16.msra.mxu0 %v510
    %692 = vmatpush.bf16.msra.mxu0 %v506
    %693 = vmatmul.bf16.gmra.mxu0 %v175
    %v694 = vpop.f32.mrf.mxu0
    %v695 = vadd.f32 %v676, %v694
    %v696 = vpop.f32.mrf.mxu0
    %v697 = vadd.f32 %v678, %v696
    %698 = vmatmul.bf16.gmra.mxu0 %v178
    %v699 = vpop.f32.mrf.mxu0
    %v700 = vadd.f32 %v681, %v699
    %v701 = vpop.f32.mrf.mxu0
    %v702 = vadd.f32 %v683, %v701
    %703 = vdwg.mxu0
    %704 = vmatpush.bf16.msra.mxu0 %v566
    %705 = vmatpush.bf16.msra.mxu0 %v562
    %706 = vmatpush.bf16.msra.mxu0 %v558
    %707 = vmatpush.bf16.msra.mxu0 %v554
    %708 = vmatpush.bf16.msra.mxu0 %v550
    %709 = vmatpush.bf16.msra.mxu0 %v546
    %710 = vmatpush.bf16.msra.mxu0 %v542
    %711 = vmatpush.bf16.msra.mxu0 %v538
    %712 = vmatmul.bf16.gmra.mxu0 %v176
    %v713 = vpop.f32.mrf.mxu0
    %v714 = vadd.f32 %v695, %v713
    %v715 = vpop.f32.mrf.mxu0
    %v716 = vadd.f32 %v697, %v715
    %717 = vmatmul.bf16.gmra.mxu0 %v179
    %v718 = vpop.f32.mrf.mxu0
    %v719 = vadd.f32 %v700, %v718
    %v720 = vpop.f32.mrf.mxu0
    %v721 = vadd.f32 %v702, %v720
    %722 = vdwg.mxu0
    %723 = vmatpush.bf16.msra.mxu0 %v503
    %724 = vmatpush.bf16.msra.mxu0 %v499
    %725 = vmatpush.bf16.msra.mxu0 %v495
    %726 = vmatpush.bf16.msra.mxu0 %v491
    %727 = vmatpush.bf16.msra.mxu0 %v487
    %728 = vmatpush.bf16.msra.mxu0 %v483
    %729 = vmatpush.bf16.msra.mxu0 %v479
    %730 = vmatpush.bf16.msra.mxu0 %v475
    %731 = vmatmul.bf16.gmra.mxu0 %v174
    %v732 = vpop.f32.mrf.mxu0
    %v733 = vadd.f32 0.0, %v732
    %v734 = vpop.f32.mrf.mxu0
    %v735 = vadd.f32 0.0, %v734
    %736 = vmatmul.bf16.gmra.mxu0 %v177
    %v737 = vpop.f32.mrf.mxu0
    %v738 = vadd.f32 0.0, %v737
    %v739 = vpop.f32.mrf.mxu0
    %v740 = vadd.f32 0.0, %v739
    %741 = vdwg.mxu0
    %742 = vmatpush.bf16.msra.mxu0 %v535
    %743 = vmatpush.bf16.msra.mxu0 %v531
    %744 = vmatpush.bf16.msra.mxu0 %v527
    %745 = vmatpush.bf16.msra.mxu0 %v523
    %746 = vmatpush.bf16.msra.mxu0 %v519
    %747 = vmatpush.bf16.msra.mxu0 %v515
    %748 = vmatpush.bf16.msra.mxu0 %v511
    %749 = vmatpush.bf16.msra.mxu0 %v507
    %750 = vmatmul.bf16.gmra.mxu0 %v175
    %v751 = vpop.f32.mrf.mxu0
    %v752 = vadd.f32 %v733, %v751
    %v753 = vpop.f32.mrf.mxu0
    %v754 = vadd.f32 %v735, %v753
    %755 = vmatmul.bf16.gmra.mxu0 %v178
    %v756 = vpop.f32.mrf.mxu0
    %v757 = vadd.f32 %v738, %v756
    %v758 = vpop.f32.mrf.mxu0
    %v759 = vadd.f32 %v740, %v758
    %760 = vdwg.mxu0
    %761 = vmatpush.bf16.msra.mxu0 %v567
    %762 = vmatpush.bf16.msra.mxu0 %v563
    %763 = vmatpush.bf16.msra.mxu0 %v559
    %764 = vmatpush.bf16.msra.mxu0 %v555
    %765 = vmatpush.bf16.msra.mxu0 %v551
    %766 = vmatpush.bf16.msra.mxu0 %v547
    %767 = vmatpush.bf16.msra.mxu0 %v543
    %768 = vmatpush.bf16.msra.mxu0 %v539
    %769 = vmatmul.bf16.gmra.mxu0 %v176
    %v770 = vpop.f32.mrf.mxu0
    %v771 = vadd.f32 %v752, %v770
    %v772 = vpop.f32.mrf.mxu0
    %v773 = vadd.f32 %v754, %v772
    %774 = vmatmul.bf16.gmra.mxu0 %v179
    %v775 = vpop.f32.mrf.mxu0
    %v776 = vadd.f32 %v757, %v775
    %v777 = vpop.f32.mrf.mxu0
    %v778 = vadd.f32 %v759, %v777
    %779 = vdwg.mxu0
    %780 = vmatpush.bf16.msra.mxu0 %v504
    %781 = vmatpush.bf16.msra.mxu0 %v500
    %782 = vmatpush.bf16.msra.mxu0 %v496
    %783 = vmatpush.bf16.msra.mxu0 %v492
    %784 = vmatpush.bf16.msra.mxu0 %v488
    %785 = vmatpush.bf16.msra.mxu0 %v484
    %786 = vmatpush.bf16.msra.mxu0 %v480
    %787 = vmatpush.bf16.msra.mxu0 %v476
    %788 = vmatmul.bf16.gmra.mxu0 %v174
    %v789 = vpop.f32.mrf.mxu0
    %v790 = vadd.f32 0.0, %v789
    %v791 = vpop.f32.mrf.mxu0
    %v792 = vadd.f32 0.0, %v791
    %793 = vmatmul.bf16.gmra.mxu0 %v177
    %v794 = vpop.f32.mrf.mxu0
    %v795 = vadd.f32 0.0, %v794
    %v796 = vpop.f32.mrf.mxu0
    %v797 = vadd.f32 0.0, %v796
    %798 = vdwg.mxu0
    %799 = vmatpush.bf16.msra.mxu0 %v536
    %800 = vmatpush.bf16.msra.mxu0 %v532
    %801 = vmatpush.bf16.msra.mxu0 %v528
    %802 = vmatpush.bf16.msra.mxu0 %v524
    %803 = vmatpush.bf16.msra.mxu0 %v520
    %804 = vmatpush.bf16.msra.mxu0 %v516
    %805 = vmatpush.bf16.msra.mxu0 %v512
    %806 = vmatpush.bf16.msra.mxu0 %v508
    %807 = vmatmul.bf16.gmra.mxu0 %v175
    %v808 = vpop.f32.mrf.mxu0
    %v809 = vadd.f32 %v790, %v808
    %v810 = vpop.f32.mrf.mxu0
    %v811 = vadd.f32 %v792, %v810
    %812 = vmatmul.bf16.gmra.mxu0 %v178
    %v813 = vpop.f32.mrf.mxu0
    %v814 = vadd.f32 %v795, %v813
    %v815 = vpop.f32.mrf.mxu0
    %v816 = vadd.f32 %v797, %v815
    %817 = vdwg.mxu0
    %818 = vmatpush.bf16.msra.mxu0 %v568
    %819 = vmatpush.bf16.msra.mxu0 %v564
    %820 = vmatpush.bf16.msra.mxu0 %v560
    %821 = vmatpush.bf16.msra.mxu0 %v556
    %822 = vmatpush.bf16.msra.mxu0 %v552
    %823 = vmatpush.bf16.msra.mxu0 %v548
    %824 = vmatpush.bf16.msra.mxu0 %v544
    %825 = vmatpush.bf16.msra.mxu0 %v540
    %826 = vmatmul.bf16.gmra.mxu0 %v176
    %v827 = vpop.f32.mrf.mxu0
    %v828 = vadd.f32 %v809, %v827
    %v829 = vpop.f32.mrf.mxu0
    %v830 = vadd.f32 %v811, %v829
    %831 = vmatmul.bf16.gmra.mxu0 %v179
    %v832 = vpop.f32.mrf.mxu0
    %v833 = vadd.f32 %v814, %v832
    %v834 = vpop.f32.mrf.mxu0
    %v835 = vadd.f32 %v816, %v834
    %836 = vdwg.mxu0
    %837 = vmatpush.bf16.msra.mxu0 %v505
    %838 = vmatpush.bf16.msra.mxu0 %v501
    %839 = vmatpush.bf16.msra.mxu0 %v497
    %840 = vmatpush.bf16.msra.mxu0 %v493
    %841 = vmatpush.bf16.msra.mxu0 %v489
    %842 = vmatpush.bf16.msra.mxu0 %v485
    %843 = vmatpush.bf16.msra.mxu0 %v481
    %844 = vmatpush.bf16.msra.mxu0 %v477
    %845 = vmatmul.bf16.gmra.mxu0 %v174
    %v846 = vpop.f32.mrf.mxu0
    %v847 = vadd.f32 0.0, %v846
    %v848 = vpop.f32.mrf.mxu0
    %v849 = vadd.f32 0.0, %v848
    %850 = vmatmul.bf16.gmra.mxu0 %v177
    %v851 = vpop.f32.mrf.mxu0
    %v852 = vadd.f32 0.0, %v851
    %v853 = vpop.f32.mrf.mxu0
    %v854 = vadd.f32 0.0, %v853
    %855 = vdwg.mxu0
    %856 = vmatpush.bf16.msra.mxu0 %v537
    %857 = vmatpush.bf16.msra.mxu0 %v533
    %858 = vmatpush.bf16.msra.mxu0 %v529
    %859 = vmatpush.bf16.msra.mxu0 %v525
    %860 = vmatpush.bf16.msra.mxu0 %v521
    %861 = vmatpush.bf16.msra.mxu0 %v517
    %862 = vmatpush.bf16.msra.mxu0 %v513
    %863 = vmatpush.bf16.msra.mxu0 %v509
    %864 = vmatmul.bf16.gmra.mxu0 %v175
    %v865 = vpop.f32.mrf.mxu0
    %v866 = vadd.f32 %v847, %v865
    %v867 = vpop.f32.mrf.mxu0
    %v868 = vadd.f32 %v849, %v867
    %869 = vmatmul.bf16.gmra.mxu0 %v178
    %v870 = vpop.f32.mrf.mxu0
    %v871 = vadd.f32 %v852, %v870
    %v872 = vpop.f32.mrf.mxu0
    %v873 = vadd.f32 %v854, %v872
    %874 = vdwg.mxu0
    %875 = vmatpush.bf16.msra.mxu0 %v569
    %876 = vmatpush.bf16.msra.mxu0 %v565
    %877 = vmatpush.bf16.msra.mxu0 %v561
    %878 = vmatpush.bf16.msra.mxu0 %v557
    %879 = vmatpush.bf16.msra.mxu0 %v553
    %880 = vmatpush.bf16.msra.mxu0 %v549
    %881 = vmatpush.bf16.msra.mxu0 %v545
    %882 = vmatpush.bf16.msra.mxu0 %v541
    %883 = vmatmul.bf16.gmra.mxu0 %v176
    %v884 = vpop.f32.mrf.mxu0
    %v885 = vadd.f32 %v866, %v884
    %v886 = vpop.f32.mrf.mxu0
    %v887 = vadd.f32 %v868, %v886
    %888 = vmatmul.bf16.gmra.mxu0 %v179
    %v889 = vpop.f32.mrf.mxu0
    %v890 = vadd.f32 %v871, %v889
    %v891 = vpop.f32.mrf.mxu0
    %v892 = vadd.f32 %v873, %v891
    %893 = vdwg.mxu0
    %v894 = vadd.f32 %v714, %v771
    %v895 = vadd.f32 %v894, %v828
    %v896 = vadd.f32 %v895, %v885
    %897 = vadd.xlane.f32.xlu0 %v896
    %v898 = vpop.xlane.xlu0 %897
    %v899 = vadd.f32 %v716, %v773
    %v900 = vadd.f32 %v899, %v830
    %v901 = vadd.f32 %v900, %v887
    %902 = vadd.xlane.f32.xlu0 %v901
    %v903 = vpop.xlane.xlu0 %902
    %v904 = vadd.f32 %v719, %v776
    %v905 = vadd.f32 %v904, %v833
    %v906 = vadd.f32 %v905, %v890
    %907 = vadd.xlane.f32.xlu0 %v906
    %v908 = vpop.xlane.xlu0 %907
    %v909 = vadd.f32 %v721, %v778
    %v910 = vadd.f32 %v909, %v835
    %v911 = vadd.f32 %v910, %v892
    %912 = vadd.xlane.f32.xlu0 %v911
    %v913 = vpop.xlane.xlu0 %912
    %v914 = vadd.f32 %v898, %v903
    %v915 = vadd.f32 %v914, %v908
    %v916 = vadd.f32 %v915, %v913
    %v917 = vmul.f32 %v916, 0.00048828125
    %919 = vset.pattern.permute.xlu0 0
    %920 = vperm.xlu0 %919, %v917
    %v921 = vpop.permute.xlu0 %920
    %v923 = vsub.f32 %v714, %v921
    %v924 = vsub.f32 %v771, %v921
    %v925 = vsub.f32 %v828, %v921
    %v926 = vsub.f32 %v885, %v921
    %v927 = vsub.f32 %v716, %v921
    %v928 = vsub.f32 %v773, %v921
    %v929 = vsub.f32 %v830, %v921
    %v930 = vsub.f32 %v887, %v921
    %v931 = vsub.f32 %v719, %v921
    %v932 = vsub.f32 %v776, %v921
    %v933 = vsub.f32 %v833, %v921
    %v934 = vsub.f32 %v890, %v921
    %v935 = vsub.f32 %v721, %v921
    %v936 = vsub.f32 %v778, %v921
    %v937 = vsub.f32 %v835, %v921
    %v938 = vsub.f32 %v892, %v921
    %v939 = vmul.f32 %v923, %v923
    %v940 = vmul.f32 %v924, %v924
    %v941 = vmul.f32 %v925, %v925
    %v942 = vmul.f32 %v926, %v926
    %v943 = vmul.f32 %v927, %v927
    %v944 = vmul.f32 %v928, %v928
    %v945 = vmul.f32 %v929, %v929
    %v946 = vmul.f32 %v930, %v930
    %v947 = vmul.f32 %v931, %v931
    %v948 = vmul.f32 %v932, %v932
    %v949 = vmul.f32 %v933, %v933
    %v950 = vmul.f32 %v934, %v934
    %v951 = vmul.f32 %v935, %v935
    %v952 = vmul.f32 %v936, %v936
    %v953 = vmul.f32 %v937, %v937
    %v954 = vmul.f32 %v938, %v938
    %v955 = vadd.f32 %v939, %v940
    %v956 = vadd.f32 %v955, %v941
    %v957 = vadd.f32 %v956, %v942
    %958 = vadd.xlane.f32.xlu0 %v957
    %v959 = vpop.xlane.xlu0 %958
    %v960 = vadd.f32 %v943, %v944
    %v961 = vadd.f32 %v960, %v945
    %v962 = vadd.f32 %v961, %v946
    %963 = vadd.xlane.f32.xlu0 %v962
    %v964 = vpop.xlane.xlu0 %963
    %v965 = vadd.f32 %v947, %v948
    %v966 = vadd.f32 %v965, %v949
    %v967 = vadd.f32 %v966, %v950
    %968 = vadd.xlane.f32.xlu0 %v967
    %v969 = vpop.xlane.xlu0 %968
    %v970 = vadd.f32 %v951, %v952
    %v971 = vadd.f32 %v970, %v953
    %v972 = vadd.f32 %v971, %v954
    %973 = vadd.xlane.f32.xlu0 %v972
    %v974 = vpop.xlane.xlu0 %973
    %v975 = vadd.f32 %v959, %v964
    %v976 = vadd.f32 %v975, %v969
    %v977 = vadd.f32 %v976, %v974
    %v978 = vmul.f32 %v977, 0.00048828125
    %v979 = vld [vmem:[%s2] sm:$0xff]
    %v980 = vadd.f32 %v978, 1e-05
    %v981 = vrsqrt.pop %v980
    %v982 = vmul.f32 %v981, %v980
    %v983 = vmul.f32 %v982, %v981
    %v984 = vmul.f32 0.5, %v983
    %v985 = vsub.f32 1.5, %v984
    %v986 = vmul.f32 %v981, %v985
    %vm987 = vweird.f32 %v980
    %vm988 = vweird.f32 %v981
    %vm989 = vmor %vm987, %vm988
    %v990 = vsel %vm989, %v981, %v986
    %v991 = vmul.f32 %v979, %v990
    %v992 = vld [vmem:[%s3] sm:$0xff]
    %994 = vset.pattern.permute.xlu0 0
    %995 = vperm.xlu0 %994, %v991
    %v996 = vpop.permute.xlu0 %995
    %v998 = vmul.f32 %v923, %v996
    %v999 = vmul.f32 %v924, %v996
    %v1000 = vmul.f32 %v925, %v996
    %v1001 = vmul.f32 %v926, %v996
    %v1002 = vmul.f32 %v927, %v996
    %v1003 = vmul.f32 %v928, %v996
    %v1004 = vmul.f32 %v929, %v996
    %v1005 = vmul.f32 %v930, %v996
    %v1006 = vmul.f32 %v931, %v996
    %v1007 = vmul.f32 %v932, %v996
    %v1008 = vmul.f32 %v933, %v996
    %v1009 = vmul.f32 %v934, %v996
    %v1010 = vmul.f32 %v935, %v996
    %v1011 = vmul.f32 %v936, %v996
    %v1012 = vmul.f32 %v937, %v996
    %v1013 = vmul.f32 %v938, %v996
    %1015 = vset.pattern.permute.xlu0 0
    %1016 = vperm.xlu0 %1015, %v992
    %v1017 = vpop.permute.xlu0 %1016
    %v1019 = vadd.f32 %v998, %v1017
    %v1020 = vadd.f32 %v999, %v1017
    %v1021 = vadd.f32 %v1000, %v1017
    %v1022 = vadd.f32 %v1001, %v1017
    %v1023 = vadd.f32 %v1002, %v1017
    %v1024 = vadd.f32 %v1003, %v1017
    %v1025 = vadd.f32 %v1004, %v1017
    %v1026 = vadd.f32 %v1005, %v1017
    %v1027 = vadd.f32 %v1006, %v1017
    %v1028 = vadd.f32 %v1007, %v1017
    %v1029 = vadd.f32 %v1008, %v1017
    %v1030 = vadd.f32 %v1009, %v1017
    %v1031 = vadd.f32 %v1010, %v1017
    %v1032 = vadd.f32 %v1011, %v1017
    %v1033 = vadd.f32 %v1012, %v1017
    %v1034 = vadd.f32 %v1013, %v1017
    %v1035 = vmax.f32 %v1019, 0.0
    %v1036 = vmax.f32 %v1020, 0.0
    %v1037 = vmax.f32 %v1021, 0.0
    %v1038 = vmax.f32 %v1022, 0.0
    %v1039 = vmax.f32 %v1023, 0.0
    %v1040 = vmax.f32 %v1024, 0.0
    %v1041 = vmax.f32 %v1025, 0.0
    %v1042 = vmax.f32 %v1026, 0.0
    %v1043 = vmax.f32 %v1027, 0.0
    %v1044 = vmax.f32 %v1028, 0.0
    %v1045 = vmax.f32 %v1029, 0.0
    %v1046 = vmax.f32 %v1030, 0.0
    %v1047 = vmax.f32 %v1031, 0.0
    %v1048 = vmax.f32 %v1032, 0.0
    %v1049 = vmax.f32 %v1033, 0.0
    %v1050 = vmax.f32 %v1034, 0.0
    %1051 = vst [vmem:[#allocation7] sm:$0xff] %v1035
    %1052 = vst [vmem:[#allocation7 + $0x8] sm:$0xff] %v1036
    %1053 = vst [vmem:[#allocation7 + $0x10] sm:$0xff] %v1039
    %1054 = vst [vmem:[#allocation7 + $0x18] sm:$0xff] %v1040
    %1055 = vst [vmem:[#allocation7 + $0x20] sm:$0xff] %v1043
    %1056 = vst [vmem:[#allocation7 + $0x28] sm:$0xff] %v1044
    %1057 = vst [vmem:[#allocation7 + $0x30] sm:$0xff] %v1047
    %1058 = vst [vmem:[#allocation7 + $0x38] sm:$0xff] %v1048
    %s1059 = scalar_lea.vmem [#allocation7], 64
    %1060 = vst [vmem:[%s1059] sm:$0xff] %v1037
    %1061 = vst [vmem:[%s1059 + $0x8] sm:$0xff] %v1038
    %1062 = vst [vmem:[%s1059 + $0x10] sm:$0xff] %v1041
    %1063 = vst [vmem:[%s1059 + $0x18] sm:$0xff] %v1042
    %1064 = vst [vmem:[%s1059 + $0x20] sm:$0xff] %v1045
    %1065 = vst [vmem:[%s1059 + $0x28] sm:$0xff] %v1046
    %1066 = vst [vmem:[%s1059 + $0x30] sm:$0xff] %v1049
    %1067 = vst [vmem:[%s1059 + $0x38] sm:$0xff] %v1050
    // Predicated region
    $region26: #{tpu_custom_call.1} parent=1 // pred_check
      _
    $region27: #{tpu_custom_call.1} parent=1 // pred_check_branch
      %1069 = sbr.rel (0) target = $region29
    $region28: #{tpu_custom_call.1} parent=1 // pred_region
      %1071 = vsyncadd [#allocation4], 0
      %s1072 = sshll.u32 [#allocation7], 4
      %s1073 = int_to_ptr.vmem [resolvable:$true] %s1072
      %s1074 = sshll.u32 %s4, 4
      %s1075 = int_to_ptr.hbm [resolvable:$true] %s1074
      %1080 = dma.vmem_to_hbm [thread:$0]  %s1073, 2048, %s1075, [#allocation4], 256, 256, 16
    $region29: #{tpu_custom_call.1} parent=1 // pred_fallthru
      _
    // Predicated region
    $region30: #{tpu_custom_call.1} parent=1 // pred_check
      _
    $region31: #{tpu_custom_call.1} parent=1 // pred_check_branch
      %1082 = sbr.rel (0) target = $region33
    $region32: #{tpu_custom_call.1} parent=1 // pred_region
      %1084 = dma.done [#allocation4], 2048
    $region33: #{tpu_custom_call.1} parent=1 // pred_fallthru
      _
    %1085 = vsyncpa [#allocation3], 1
    %1086 = vsyncpa [#allocation6], 1
    %1087 = vsyncpa [#allocation4], 1

</llo_original>
